<compile_context>
chip_gen: v6e
topology: v6e:2x2x1
jax: 0.10.0
libtpu: 0.0.40
codegen_flags: <defaults>
</compile_context>

<pallas_src>
import jax
import jax.numpy as jnp
from jax import lax
from jax.experimental import pallas as pl
from jax.experimental.pallas import tpu as pltpu


def _conv3x3_colmajor_kernel(x_ref, w_ref, o_ref):
    """y[co, m] = sum_k w[co, k] * x_col[k, m] — one MXU contraction per tile.

    x_ref : [1, 9*C_in, M_tile]   im2col slab (K-major, lane-dense M axis)  VMEM
    w_ref : [C_out, 9*C_in]       folded weights, K ordered (ci, kh, kw)    VMEM
    o_ref : [1, C_out, M_tile]    channels-major, lane-dense output         VMEM
    """
    acc = lax.dot_general(
        w_ref[...], x_ref[0],
        dimension_numbers=(((1,), (0,)), ((), ())),
        preferred_element_type=jnp.float32)            # [C_out, M_tile]
    o_ref[0] = acc.astype(o_ref.dtype)


def _vmem_limit_bytes():
    """~75% of this generation's VMEM capacity (derived, not hard-coded)."""
    cap = 64 * 1024 * 1024
    try:
        cap = int(getattr(pltpu.get_tpu_info(), "vmem_capacity_bytes", cap))
    except Exception:
        pass
    limit = (cap * 3) // 4
    # Clamp: >=32 MiB so small tiles always fit, <=96 MiB headroom everywhere.
    return max(32 * 1024 * 1024, min(limit, 96 * 1024 * 1024))


def _pick_m_tile(m, k_dim, cout, in_itemsize, out_itemsize, vmem_budget_bytes):
    """Largest M tile (multiple of 128, dividing M) fitting a 2x-buffered budget."""
    per_col = 2 * k_dim * in_itemsize + 2 * cout * out_itemsize   # double-buffered
    max_cols = max(128, vmem_budget_bytes // max(per_col, 1))
    if m <= max_cols or m % 128 != 0:
        return m            # whole-M block (block_shape == full dim is always legal)
    best = 128
    d = 128
    while d <= min(m, max_cols):
        if m % d == 0:
            best = d
        d += 128
    return best


def new_mixed_op_skip_forward(x_nchw, weight_oihw, stride=1,
                              compute_dtype=jnp.bfloat16, m_tile=None):
    """Forward of NewMixedOp_skip (chosen op = conv3x3, stride=1, pad=1, no bias).

    x_nchw      : [N, C_in, H, W]
    weight_oihw : [C_out, C_in, 3, 3]   (PyTorch Conv2d layout)
    returns     : [N, C_out, H, W]      (dtype of x_nchw)
    """
    assert stride == 1, "only the stride=1 conv primitive is implemented"
    n, cin, h, w = x_nchw.shape
    cout, cin_w, kh_, kw_ = weight_oihw.shape
    assert (cin_w, kh_, kw_) == (cin, 3, 3)

    out_dtype = x_nchw.dtype
    m = h * w
    k_dim = 9 * cin

    # ---- single wrapper pre-pass: NCHW -> K-major / spatial-last im2col slab.
    # x_col[n, ci*9 + dh*3 + dw, h*W + w] = x_pad[n, ci, h+dh, w+dw]
    x_c = x_nchw.astype(compute_dtype)                        # bf16 into the MXU
    x_pad = jnp.pad(x_c, ((0, 0), (0, 0), (1, 1), (1, 1)))
    taps = [x_pad[:, :, dh:dh + h, dw:dw + w]
            for dh in range(3) for dw in range(3)]            # 9 x [N, C_in, H, W]
    x_col = jnp.stack(taps, axis=2).reshape(n, k_dim, m)      # [N, 9*C_in, H*W]

    # OIHW flattened over (ci, kh, kw) already matches the K ordering above.
    w_f = weight_oihw.reshape(cout, k_dim).astype(compute_dtype)

    vmem_limit = _vmem_limit_bytes()
    if m_tile is None:
        m_tile = _pick_m_tile(m, k_dim, cout,
                              jnp.dtype(compute_dtype).itemsize,
                              jnp.dtype(out_dtype).itemsize,
                              vmem_limit // 2)
    assert m % m_tile == 0

    cost = pl.CostEstimate(
        flops=2 * n * cout * k_dim * m,
        transcendentals=0,
        bytes_accessed=(n * k_dim * m * jnp.dtype(compute_dtype).itemsize
                        + cout * k_dim * jnp.dtype(compute_dtype).itemsize
                        + n * cout * m * jnp.dtype(out_dtype).itemsize))

    y_flat = pl.pallas_call(
        _conv3x3_colmajor_kernel,
        out_shape=jax.ShapeDtypeStruct((n, cout, m), out_dtype),
        grid=(n, m // m_tile),
        in_specs=[
            pl.BlockSpec((1, k_dim, m_tile), lambda b, t: (b, 0, t)),
            pl.BlockSpec((cout, k_dim), lambda b, t: (0, 0)),
        ],
        out_specs=pl.BlockSpec((1, cout, m_tile), lambda b, t: (b, 0, t)),
        compiler_params=pltpu.CompilerParams(
            dimension_semantics=("parallel", "parallel"),
            vmem_limit_bytes=vmem_limit),
        cost_estimate=cost,
    )(x_col, w_f)

    # Channels-major flat output -> NCHW is a free metadata reshape.
    return y_flat.reshape(n, cout, h, w)


def _reference_conv(x_nchw, weight_oihw):
    """Pure-JAX reference (== torch.nn.Conv2d(..., 3, 1, padding=1, bias=False))."""
    return lax.conv_general_dilated(
        x_nchw, weight_oihw,
        window_strides=(1, 1), padding=((1, 1), (1, 1)),
        dimension_numbers=("NCHW", "OIHW", "NCHW"),
        preferred_element_type=jnp.float32)


if __name__ == "__main__":
    key = jax.random.PRNGKey(0)
    k_x, k_w = jax.random.split(key)

    # Small shapes consistent with the module: batch=2, c_in=4, c_out=8, 16x16.
    N, C_IN, C_OUT, H, W = 2, 4, 8, 16, 16
    x = jax.random.normal(k_x, (N, C_IN, H, W), dtype=jnp.float32)
    w = jax.random.normal(k_w, (C_OUT, C_IN, 3, 3), dtype=jnp.float32) * 0.1

    fwd = jax.jit(lambda xx, ww: new_mixed_op_skip_forward(xx, ww, stride=1))
    y = jax.block_until_ready(fwd(x, w))
    assert y.shape == (N, C_OUT, H, W)

    # Reference computed on the same bf16-cast operands (kernel accumulates f32).
    y_ref = jax.block_until_ready(
        _reference_conv(x.astype(jnp.bfloat16), w.astype(jnp.bfloat16)))
    assert jnp.allclose(y, y_ref.astype(y.dtype), atol=1e-2, rtol=1e-2), \
        "mismatch vs reference"

    print("KERNEL_OK")
</pallas_src>

<mosaic_0001>
module attributes {stable_mosaic.version = 11 : i64} {
  func.func @_conv3x3_colmajor_kernel(%arg0: i32, %arg1: i32, %arg2: memref<1x36x256xbf16, #tpu.memory_space<vmem>>, %arg3: memref<8x36xbf16, #tpu.memory_space<vmem>>, %arg4: memref<1x8x256xf32, #tpu.memory_space<vmem>>) attributes {dimension_semantics = [#tpu.dimension_semantics<parallel>, #tpu.dimension_semantics<parallel>], iteration_bounds = array<i64: 2, 1>, scalar_prefetch = 0 : i64, scratch_operands = 0 : i64, tpu.core_type = #tpu.core_type<tc>, window_params = [{transform_indices = @transform_0, window_bounds = array<i64: 1, 36, 256>}, {pipeline_mode = #tpu.pipeline_mode<synchronous>, transform_indices = @transform_1, window_bounds = array<i64: 8, 36>}, {transform_indices = @transform_2, window_bounds = array<i64: 1, 8, 256>}]} {
    %c0 = arith.constant 0 : index
    %c0_0 = arith.constant 0 : index
    %0 = vector.load %arg3[%c0, %c0_0] : memref<8x36xbf16, #tpu.memory_space<vmem>>, vector<8x36xbf16>
    %c0_1 = arith.constant 0 : index
    %c0_2 = arith.constant 0 : index
    %c0_3 = arith.constant 0 : index
    %1 = vector.load %arg2[%c0_1, %c0_2, %c0_3] : memref<1x36x256xbf16, #tpu.memory_space<vmem>>, vector<1x36x256xbf16>
    %2 = vector.shape_cast %1 : vector<1x36x256xbf16> to vector<36x256xbf16>
    %cst = arith.constant dense<0.000000e+00> : vector<8x256xf32>
    %3 = tpu.matmul %0, %2, %cst {dimension_numbers = #tpu.dot_dimension_numbers<[1], [0], [0], [1], [0, 0, 1, 1], [], []>} : vector<8x36xbf16>, vector<36x256xbf16>, vector<8x256xf32> -> vector<8x256xf32>
    %c0_4 = arith.constant 0 : index
    %c0_5 = arith.constant 0 : index
    %c0_6 = arith.constant 0 : index
    %4 = vector.load %arg4[%c0_4, %c0_5, %c0_6] : memref<1x8x256xf32, #tpu.memory_space<vmem>>, vector<1x8x256xf32>
    %5 = vector.shape_cast %4 : vector<1x8x256xf32> to vector<8x256xf32>
    %6 = vector.shape_cast %3 : vector<8x256xf32> to vector<1x8x256xf32>
    tpu.vector_store %arg4[%c0_4, %c0_5, %c0_6], %6 {strides = array<i32>} : memref<1x8x256xf32, #tpu.memory_space<vmem>>, vector<1x8x256xf32>,
    return
  }
  func.func @transform_0(%arg0: i32, %arg1: i32) -> (i32, i32, i32) {
    %c0_i32 = arith.constant 0 : i32
    %c0_i32_0 = arith.constant 0 : i32
    return %arg0, %c0_i32, %arg1 : i32, i32, i32
  }
  func.func @transform_1(%arg0: i32, %arg1: i32) -> (i32, i32) {
    %c0_i32 = arith.constant 0 : i32
    %c0_i32_0 = arith.constant 0 : i32
    %c0_i32_1 = arith.constant 0 : i32
    return %c0_i32, %c0_i32_0 : i32, i32
  }
  func.func @transform_2(%arg0: i32, %arg1: i32) -> (i32, i32, i32) {
    %c0_i32 = arith.constant 0 : i32
    %c0_i32_0 = arith.constant 0 : i32
    return %arg0, %c0_i32, %arg1 : i32, i32, i32
  }
}

</mosaic_0001>

<llo_original>
// kernel: _lambda_.1
$region0: #{_lambda_.1}
  #allocation0 [shape = 'u32[]', space=smem, size = 0x4, offset = 0x4, fixed_abs, tag = 'smem constant byte address 0x4 - core index']
  #allocation1 [shape = 'u32[144,128]{1,0:T(1,128)}', space=vmem, size = 0x12000, scoped, tag = 'internal scratch']
  %s0 = inlined_call_operand.vmem [shape: bf16[2,36,256], index: 0, kind: input, shape index: {}]
  %s1 = inlined_call_operand.vmem [shape: bf16[8,36], index: 1, kind: input, shape index: {}]
  %s2 = inlined_call_operand.vmem [shape: f32[2,8,256], index: 2, kind: output, shape index: {}]
  %s3 = sld [smem:[#allocation0]]
  $region41: #{_lambda_.1} parent=0
    _
  %s5 = ssub.s32 1, %s3
  %s6 = scalar_select 0, %s5, %s3
  loop: start=0, step=1, limit=4
  $region2: #{_lambda_.1} parent=0 // loop_pre_header
    _
  $region3: #{_lambda_.1} parent=0 // loop_header
    %s8 = sphi 0, %s12
    %p9 = scmp.ge.s32.totalorder %s8, 4
    %s15 = sphi 0, %s27
    %s16 = sphi 0, %s23
    %s17 = sphi 0, %s15
    %s18 = sphi 0, %s16
    %s19 = sphi 0, %s17
    %s20 = sphi 0, %s18
    %s32 = sphi 0, %s34
    %s35 = sphi 0, %s32
    %s36 = sphi 0, %s35
    %s52 = sphi 0, %s36
    %s56 = sphi 0, %s56
    %s58 = sphi 0, %s56
    %s59 = sphi 0, %s58
    %s73 = sphi 0, %s59
    %s81 = sphi 0, %s83
    %s84 = sphi 0, %s81
    %s85 = sphi 0, %s84
    %s101 = sphi 0, %s85
  $region4: #{_lambda_.1} parent=0 // loop_header_branch
    %11 = sbr.rel (%p9) target = $region8
  $region5: #{_lambda_.1} parent=0 // loop_body
    %s13 = ssub.s32 %s8, 1
    %s14 = ssub.s32 %s8, 2
    %s21 = sadd.s32 1, %s16
    %p22 = scmp.ge.s32.totalorder %s21, 1
    %s23 = scalar_select %p22, 0, %s21
    %s24 = sadd.s32 1, %s15
    %s25 = scalar_select %p22, %s24, %s15
    %p26 = scmp.ge.s32.totalorder %s25, 2
    %s27 = scalar_select %p26, 0, %s25
    %s28 = ssub.s32 %s15, %s27
    %s29 = ssub.s32 %s16, %s23
    %s30 = sor.u32 %s28, %s29
    %p31 = scmp.eq.s32.totalorder %s30, 0
    %s33 = sadd.s32 %s32, 1
    %s34 = scalar_select %p31, %s32, %s33
    %p37 = pneg %p31
    %p38 = scmp.eq.s32.totalorder %s8, 1
    %p39 = por %p37, %p38
    %p40 = scmp.ne.s32.totalorder %s32, %s35
    %p41 = scmp.eq.s32.totalorder %s8, 0
    %p42 = por %p40, %p41
    %p43 = scmp.ne.s32.totalorder %s32, %s35
    %p44 = scmp.eq.s32.totalorder %s13, 1
    %p45 = por %p43, %p44
    %p46 = scmp.ne.s32.totalorder %s35, %s36
    %p47 = scmp.eq.s32.totalorder %s13, 0
    %p48 = por %p46, %p47
    %p49 = scmp.ne.s32.totalorder %s35, %s36
    %p50 = scmp.eq.s32.totalorder %s14, 1
    %p51 = por %p49, %p50
    %p53 = scmp.ne.s32.totalorder %s36, %s52
    %p54 = scmp.eq.s32.totalorder %s14, 0
    %p55 = por %p53, %p54
    %s57 = sadd.s32 %s56, 1
    %p60 = scmp.eq.s32.totalorder %s8, 1
    %p61 = scmp.ne.s32.totalorder %s56, %s58
    %p62 = scmp.eq.s32.totalorder %s8, 0
    %p63 = por %p61, %p62
    %p64 = scmp.ne.s32.totalorder %s56, %s58
    %p65 = scmp.eq.s32.totalorder %s13, 1
    %p66 = por %p64, %p65
    %p67 = scmp.ne.s32.totalorder %s58, %s59
    %p68 = scmp.eq.s32.totalorder %s13, 0
    %p69 = por %p67, %p68
    %p70 = scmp.ne.s32.totalorder %s58, %s59
    %p71 = scmp.eq.s32.totalorder %s14, 1
    %p72 = por %p70, %p71
    %p74 = scmp.ne.s32.totalorder %s59, %s73
    %p75 = scmp.eq.s32.totalorder %s14, 0
    %p76 = por %p74, %p75
    %s77 = ssub.s32 %s15, %s27
    %s78 = ssub.s32 %s16, %s23
    %s79 = sor.u32 %s77, %s78
    %p80 = scmp.eq.s32.totalorder %s79, 0
    %s82 = sadd.s32 %s81, 1
    %s83 = scalar_select %p80, %s81, %s82
    %p86 = pneg %p80
    %p87 = scmp.eq.s32.totalorder %s8, 1
    %p88 = por %p86, %p87
    %p89 = scmp.ne.s32.totalorder %s81, %s84
    %p90 = scmp.eq.s32.totalorder %s8, 0
    %p91 = por %p89, %p90
    %p92 = scmp.ne.s32.totalorder %s81, %s84
    %p93 = scmp.eq.s32.totalorder %s13, 1
    %p94 = por %p92, %p93
    %p95 = scmp.ne.s32.totalorder %s84, %s85
    %p96 = scmp.eq.s32.totalorder %s13, 0
    %p97 = por %p95, %p96
    %p98 = scmp.ne.s32.totalorder %s84, %s85
    %p99 = scmp.eq.s32.totalorder %s14, 1
    %p100 = por %p98, %p99
    %p102 = scmp.ne.s32.totalorder %s85, %s101
    %p103 = scmp.eq.s32.totalorder %s14, 0
    %p104 = por %p102, %p103
    %p105 = scmp.le.s32.totalorder 1, %s8
    %p106 = scmp.lt.s32.totalorder %s8, 3
    %p107 = pnand %p105, %p106
    %p108 = pneg %p107
    // Predicated region
    $region9: #{_lambda_.1} parent=5 // pred_check
      _
    $region10: #{_lambda_.1} parent=5 // pred_check_branch
      %110 = sbr.rel (%p107) target = $region12
    $region11: #{_lambda_.1} parent=5 // pred_region
      %s111 = ssub.s32 %s8, 1
      // Predicated region
      $region13: #{_lambda_.1} parent=11 // pred_check
        %p112 = pneg %p69
      $region14: #{_lambda_.1} parent=11 // pred_check_branch
        %114 = sbr.rel (%p112) target = $region16
      $region15: #{_lambda_.1} parent=11 // pred_region
        _
      $region16: #{_lambda_.1} parent=11 // pred_fallthru
        _
    $region12: #{_lambda_.1} parent=5 // pred_fallthru
      _
    %p115 = scmp.lt.s32.totalorder %s8, 2
    // Predicated region
    $region17: #{_lambda_.1} parent=5 // pred_check
      %p116 = pneg %p115
    $region18: #{_lambda_.1} parent=5 // pred_check_branch
      %118 = sbr.rel (%p116) target = $region20
    $region19: #{_lambda_.1} parent=5 // pred_region
      // Predicated region
      $region21: #{_lambda_.1} parent=19 // pred_check
        %p119 = pneg %p42
      $region22: #{_lambda_.1} parent=19 // pred_check_branch
        %121 = sbr.rel (%p119) target = $region24
      $region23: #{_lambda_.1} parent=19 // pred_region
        %s122 = smul.u32 2, %s16
        %p123 = scmp.lt.s32.totalorder %s15, 1
        %s124 = scalar_select %p123, %s15, 1
        %p125 = scmp.lt.s32.totalorder %s122, 1
        %s126 = scalar_select %p125, %s122, 1
        %s127 = smul.addr %s124, 10
        %s128 = sadd.s32 %s126, %s127
        %s129 = smul.addr %s128, 4
        %s130 = scalar_lea.vmem %s0, %s129
        %s131 = smul.u32 2, %s16
      $region24: #{_lambda_.1} parent=19 // pred_fallthru
        _
    $region20: #{_lambda_.1} parent=5 // pred_fallthru
      _
    %p132 = scmp.le.s32.totalorder 1, %s8
    %p133 = scmp.lt.s32.totalorder %s8, 3
    %p134 = pnand %p132, %p133
    %p135 = pneg %p134
    // Predicated region
    $region25: #{_lambda_.1} parent=5 // pred_check
      _
    $region26: #{_lambda_.1} parent=5 // pred_check_branch
      %137 = sbr.rel (%p134) target = $region28
    $region27: #{_lambda_.1} parent=5 // pred_region
      %s138 = ssub.s32 %s8, 1
      %s139 = smul.u32 2, %s18
      %p140 = scmp.lt.s32.totalorder %s17, 1
      %s141 = scalar_select %p140, %s17, 1
      %p142 = scmp.lt.s32.totalorder %s139, 1
      %s143 = scalar_select %p142, %s139, 1
      %s144 = smul.addr %s141, 10
      %s145 = sadd.s32 %s143, %s144
      %s146 = smul.addr %s145, 4
      %s147 = scalar_lea.vmem %s0, %s146
      %p148 = pneg %p48
      %p149 = pneg %p45
      %p150 = pneg %p69
      %p151 = pneg %p66
      %p152 = pneg %p97
      %p153 = pneg %p94
      %s154 = smul.u32 2, %s18
      %p155 = scmp.lt.s32.totalorder %s17, 1
      %s156 = scalar_select %p155, %s17, 1
      %p157 = scmp.lt.s32.totalorder %s154, 1
      %s158 = scalar_select %p157, %s154, 1
      %s159 = smul.addr %s156, 2
      %s160 = sadd.s32 %s158, %s159
      %s161 = smul.addr %s160, 8
      %s162 = scalar_lea.vmem %s2, %s161
      %s163 = smul.u32 2, %s18
      %p164 = scmp.lt.s32.totalorder %s17, 1
      %s165 = scalar_select %p164, %s17, 1
      %p166 = scmp.lt.s32.totalorder %s163, 1
      %s167 = scalar_select %p166, %s163, 1
      %s168 = smul.addr %s165, 10
      %s169 = sadd.s32 %s167, %s168
      %s170 = smul.addr %s169, 4
      %s171 = scalar_lea.vmem %s0, %s170
      %s172 = smul.u32 2, %s18
      %s173 = smul.u32 2, %s18
      %p174 = scmp.lt.s32.totalorder %s17, 1
      %s175 = scalar_select %p174, %s17, 1
      %p176 = scmp.lt.s32.totalorder %s173, 1
      %s177 = scalar_select %p176, %s173, 1
      %s178 = smul.addr %s175, 2
      %s179 = sadd.s32 %s177, %s178
      %s180 = smul.addr %s179, 8
      %s181 = scalar_lea.vmem %s2, %s180
      %s182 = smul.u32 2, %s18
      %v184 = vld [vmem:[%s1] sm:$0xf]
      %v185 = vld [vmem:[%s171] sm:$0xff]
      %v186 = vld [vmem:[%s171 + $0x8] sm:$0xff]
      %v187 = vld [vmem:[%s171 + $0x10] sm:$0xff]
      %v188 = vld [vmem:[%s171 + $0x18] sm:$0xff]
      %v189 = vld [vmem:[%s171 + $0x20] sm:$0x33]
      %v195 = vunpack.c.l.b16 %v185
      %v196 = vunpack.c.h.b16 %v185
      %v197 = vunpack.c.l.b16 %v186
      %v198 = vunpack.c.h.b16 %v186
      %v199 = vunpack.c.l.b16 %v187
      %v200 = vunpack.c.h.b16 %v187
      %v201 = vunpack.c.l.b16 %v188
      %v202 = vunpack.c.h.b16 %v188
      %v203 = vunpack.c.l.b16 %v189
      %v204 = vunpack.c.h.b16 %v189
      %v205 = vpack.c.b16 %v197, %v195
      %v206 = vpack.c.b16 %v198, %v196
      %v207 = vpack.c.b16 %v201, %v199
      %v208 = vpack.c.b16 %v202, %v200
      %v209 = vpack.c.b16 %v203, %v203
      %v210 = vpack.c.b16 %v204, %v204
      %vm215 = vcmask 293888
      %v217 = vsel %vm215, %v184, 0
      %vm219 = vcmask 1041408
      %v221 = vsel %vm219, %v209, 0
      %v224 = vsel %vm219, %v210, 0
      %226 = vmatprep.subr.bf16.mxu0 0
      %227 = vmatpush1.bf16.msra.mxu0 0
      %228 = vmatprep.subr.bf16.mxu0 0
      %229 = vmatpush1.bf16.msra.mxu0 0
      %230 = vmatprep.subr.bf16.mxu0 0
      %231 = vmatpush1.bf16.msra.mxu0 0
      %232 = vmatprep.subr.bf16.mxu0 0
      %233 = vmatpush1.bf16.msra.mxu0 0
      %234 = vmatprep.subr.bf16.mxu0 0
      %235 = vmatpush1.bf16.msra.mxu0 0
      %236 = vmatprep.subr.bf16.mxu0 %v224
      %237 = vmatpush1.bf16.msra.mxu0 %v221
      %238 = vmatprep.subr.bf16.mxu0 %v208
      %239 = vmatpush1.bf16.msra.mxu0 %v207
      %240 = vmatprep.subr.bf16.mxu0 %v206
      %241 = vmatpush1.bf16.msra.mxu0 %v205
      %242 = vmatprep.subr.bf16.mxu0 0
      %243 = vmatpush2.bf16.msra.mxu0 0
      %244 = vmatprep.subr.bf16.mxu0 0
      %245 = vmatpush2.bf16.msra.mxu0 0
      %246 = vmatprep.subr.bf16.mxu0 0
      %247 = vmatpush2.bf16.msra.mxu0 0
      %248 = vmatprep.subr.bf16.mxu0 0
      %249 = vmatpush2.bf16.msra.mxu0 0
      %250 = vmatprep.subr.bf16.mxu0 0
      %251 = vmatpush2.bf16.msra.mxu0 0
      %252 = vmatprep.subr.bf16.mxu0 0
      %253 = vmatpush2.bf16.msra.mxu0 0
      %254 = vmatprep.subr.bf16.mxu0 0
      %255 = vmatpush2.bf16.msra.mxu0 0
      %256 = vmatprep.subr.bf16.mxu0 0
      %257 = vmatpush2.bf16.msra.mxu0 0
      %258 = vmatprep.mubr.bf16.mxu0 0
      %259 = vmatmul.mubr.bf16.gmra.mxu0 %v217
      %v260 = vpop.f32.mrf.mxu0
      %v261 = vadd.f32 0.0, %v260
      %v262 = vpop.f32.mrf.mxu0
      %v263 = vadd.f32 0.0, %v262
      %v264 = vpop.f32.mrf.mxu0
      %v265 = vpop.f32.mrf.mxu0
      %266 = vdwg.mxu0
      %267 = vst [vmem:[%s181] sm:$0xff] %v261
      %268 = vst [vmem:[%s181 + $0x8] sm:$0xff] %v263
      %s269 = smul.u32 2, %s18
      %p270 = scmp.lt.s32.totalorder %s17, 1
      %s271 = scalar_select %p270, %s17, 1
      %p272 = scmp.lt.s32.totalorder %s269, 1
      %s273 = scalar_select %p272, %s269, 1
      %s274 = smul.addr %s271, 2
      %s275 = sadd.s32 %s273, %s274
      %s276 = smul.addr %s275, 8
      %s277 = scalar_lea.vmem %s2, %s276
      // Predicated region
      $region29: #{_lambda_.1} parent=27 // pred_check
        %p278 = pneg %p94
      $region30: #{_lambda_.1} parent=27 // pred_check_branch
        %280 = sbr.rel (%p278) target = $region32
      $region31: #{_lambda_.1} parent=27 // pred_region
        %s281 = smul.u32 2, %s18
      $region32: #{_lambda_.1} parent=27 // pred_fallthru
        _
    $region28: #{_lambda_.1} parent=5 // pred_fallthru
      _
    %p282 = scmp.le.s32.totalorder 2, %s8
    // Predicated region
    $region33: #{_lambda_.1} parent=5 // pred_check
      %p283 = pneg %p282
    $region34: #{_lambda_.1} parent=5 // pred_check_branch
      %285 = sbr.rel (%p283) target = $region36
    $region35: #{_lambda_.1} parent=5 // pred_region
      %s286 = ssub.s32 %s8, 2
      // Predicated region
      $region37: #{_lambda_.1} parent=35 // pred_check
        %p287 = pneg %p100
      $region38: #{_lambda_.1} parent=35 // pred_check_branch
        %289 = sbr.rel (%p287) target = $region40
      $region39: #{_lambda_.1} parent=35 // pred_region
        %s290 = smul.u32 2, %s20
        %p291 = scmp.lt.s32.totalorder %s19, 1
        %s292 = scalar_select %p291, %s19, 1
        %p293 = scmp.lt.s32.totalorder %s290, 1
        %s294 = scalar_select %p293, %s290, 1
        %s295 = smul.addr %s292, 2
        %s296 = sadd.s32 %s294, %s295
        %s297 = smul.addr %s296, 8
        %s298 = scalar_lea.vmem %s2, %s297
      $region40: #{_lambda_.1} parent=35 // pred_fallthru
        _
    $region36: #{_lambda_.1} parent=5 // pred_fallthru
      _
  $region6: #{_lambda_.1} parent=0 // loop_footer
    %s12 = sadd.s32 1, %s8
  $region7: #{_lambda_.1} parent=0 // loop_footer_branch
    %7 = sbr.rel target = $region3
  $region8: #{_lambda_.1} parent=0 // loop_exit
    _

</llo_original>
